<compile_context>
chip_gen: v6e
topology: v6e:2x2x1
jax: 0.10.0
libtpu: 0.0.40
codegen_flags: <defaults>
</compile_context>

<pallas_src>
import jax
import jax.numpy as jnp
from jax import lax
from jax.experimental import pallas as pl
from jax.experimental.pallas import tpu as pltpu


def _round_up(a: int, b: int) -> int:
    return (a + b - 1) // b * b


def _cnn2_fused_kernel(xp_ref, w1_ref, b1_ref, w2_ref, b2_ref, o_ref, acc_ref):
    # xp_ref : (1, TN, K1)        im2col patches for this conv1 position
    # w1_ref : (H_pad, K1)        conv1 weight, PyTorch layout (resident)
    # b1_ref : (1, H_pad)         conv1 bias (f32, resident)
    # w2_ref : (1, H_pad, D_pad)  conv2 weight slice for this position
    # b2_ref : (1, D_pad)         conv2 bias (f32, resident)
    # o_ref  : (TN, D_pad)        output tile (lane-dense)
    # acc_ref: (TN, D_pad) f32    conv2 accumulator (VMEM scratch)
    p = pl.program_id(1)

    @pl.when(p == 0)
    def _init():
        acc_ref[...] = jnp.zeros_like(acc_ref)

    x = xp_ref[0]                   # (TN, K1)
    w1 = w1_ref[...]                # (H_pad, K1)
    # conv1 at this position: contract on K of BOTH operands (no wrapper transpose;
    # the MXU handles a transposed-RHS contraction natively).
    z1 = lax.dot_general(
        x, w1,
        dimension_numbers=(((1,), (1,)), ((), ())),
        preferred_element_type=jnp.float32,
    )                                # (TN, H_pad) f32
    z1 = z1 + b1_ref[...]            # f32 bias

    # softplus, kept in f32 on the accumulator (v5e has no bf16 VPU/EUP path).
    a1 = jnp.maximum(z1, 0.0) + jnp.log(1.0 + jnp.exp(-jnp.abs(z1)))

    # conv2 contribution of this position, accumulated over the position grid axis.
    w2 = w2_ref[0]                   # (H_pad, D_pad)
    acc_ref[...] += jnp.dot(a1.astype(w2.dtype), w2,
                            preferred_element_type=jnp.float32)

    @pl.when(p == pl.num_programs(1) - 1)
    def _finalize():
        o_ref[...] = jnp.tanh(acc_ref[...] + b2_ref[...]).astype(o_ref.dtype)


def _cnn_2layer_forward_impl(x, w1, b1, w2, b2, *, space_stride=1, use_bf16=True):
    N, C, S, T = x.shape
    H, C_w, ks, kt = w1.shape
    D_out, H_w, k2s, k2t = w2.shape
    assert C_w == C and H_w == H
    S1 = (S - ks) // space_stride + 1
    T1 = T - kt + 1
    # conv2's kernel must cover the whole conv1 output (as in CNN_2layer).
    assert (k2s, k2t) == (S1, T1), "conv2 kernel must equal conv1 output extent"
    P = S1 * T1
    K1 = C * ks * kt

    # ---- im2col for conv1 ((c, i, j) flatten order == PyTorch weight flatten) ----
    rows = (jnp.arange(S1) * space_stride)[:, None] + jnp.arange(ks)[None, :]  # (S1, ks)
    cols = jnp.arange(T1)[:, None] + jnp.arange(kt)[None, :]                   # (T1, kt)
    patches = x[:, :, rows[:, None, :, None], cols[None, :, None, :]]          # (N,C,S1,T1,ks,kt)
    patches = patches.transpose(0, 2, 3, 1, 4, 5).reshape(N, P, K1)            # (N, P, K1)

    # ---- pad to TPU-friendly shapes (lane = 128, f32 sublane = 8) ----------------
    TN = min(_round_up(N, 8), 128)       # batch rows per kernel block
    N_pad = _round_up(N, TN)
    H_pad = _round_up(H, 128)
    D_pad = _round_up(D_out, 128)
    nb = N_pad // TN

    op_dtype = jnp.bfloat16 if use_bf16 else jnp.float32

    xp = jnp.zeros((P, N_pad, K1), op_dtype).at[:, :N, :].set(
        patches.transpose(1, 0, 2).astype(op_dtype))
    w1p = jnp.zeros((H_pad, K1), op_dtype).at[:H, :].set(
        w1.reshape(H, K1).astype(op_dtype))
    b1p = jnp.zeros((1, H_pad), jnp.float32).at[:, :H].set(
        b1.astype(jnp.float32)[None, :])
    # conv2 weight packed per conv1 output position: (P, H, D_out), zero padded so
    # padded channels / padded outputs contribute exactly 0.
    w2p = jnp.zeros((P, H_pad, D_pad), op_dtype).at[:, :H, :D_out].set(
        w2.reshape(D_out, H, P).transpose(2, 1, 0).astype(op_dtype))
    b2p = jnp.zeros((1, D_pad), jnp.float32).at[:, :D_out].set(
        b2.astype(jnp.float32)[None, :])

    out = pl.pallas_call(
        _cnn2_fused_kernel,
        out_shape=jax.ShapeDtypeStruct((N_pad, D_pad), jnp.float32),
        grid=(nb, P),
        in_specs=[
            pl.BlockSpec((1, TN, K1), lambda b, p: (p, b, 0)),         # patches
            pl.BlockSpec((H_pad, K1), lambda b, p: (0, 0)),            # W1 (resident)
            pl.BlockSpec((1, H_pad), lambda b, p: (0, 0)),             # b1 (resident)
            pl.BlockSpec((1, H_pad, D_pad), lambda b, p: (p, 0, 0)),   # W2[p]
            pl.BlockSpec((1, D_pad), lambda b, p: (0, 0)),             # b2 (resident)
        ],
        out_specs=pl.BlockSpec((TN, D_pad), lambda b, p: (b, 0)),
        scratch_shapes=[pltpu.VMEM((TN, D_pad), jnp.float32)],
        compiler_params=pltpu.CompilerParams(
            dimension_semantics=("parallel", "arbitrary"),
            vmem_limit_bytes=32 * 1024 * 1024,   # fits v7x's 64 MiB VMEM budget
        ),
    )(xp, w1p, b1p, w2p, b2p)

    return out[:N, :D_out]


cnn_2layer_forward = jax.jit(_cnn_2layer_forward_impl,
                             static_argnames=("space_stride", "use_bf16"))


def _reference_forward(x, w1, b1, w2, b2, space_stride, match_kernel_precision):
    """Pure-JAX reference of CNN_2layer.forward (real convolutions)."""
    f32 = jnp.float32
    if match_kernel_precision:
        cast = lambda a: a.astype(jnp.bfloat16).astype(f32)
        x_c, w1_c, w2_c = cast(x), cast(w1), cast(w2)
    else:
        x_c, w1_c, w2_c = x, w1, w2
    dn = ("NCHW", "OIHW", "NCHW")
    z1 = lax.conv_general_dilated(
        x_c, w1_c, window_strides=(space_stride, 1), padding="VALID",
        dimension_numbers=dn, precision=lax.Precision.HIGHEST)
    z1 = z1 + b1[None, :, None, None]
    if match_kernel_precision:
        a1 = jnp.maximum(z1, 0.0) + jnp.log(1.0 + jnp.exp(-jnp.abs(z1)))
        a1 = a1.astype(jnp.bfloat16).astype(f32)
    else:
        a1 = jax.nn.softplus(z1)
    z2 = lax.conv_general_dilated(
        a1, w2_c, window_strides=(1, 1), padding="VALID",
        dimension_numbers=dn, precision=lax.Precision.HIGHEST)
    z2 = z2 + b2[None, :, None, None]
    assert z2.shape[2] == 1 and z2.shape[3] == 1
    return jnp.tanh(z2.reshape(z2.shape[0], -1))


if __name__ == "__main__":
    # Small shapes consistent with CNN_2layer's constructor defaults:
    #   D_stim = (channels, space, time), H = num cell types, D_out = n_cell
    N = 2
    C, S, T = 4, 12, 20
    H = 8
    D_out = 8
    temp_filter_size, space_filter_size, space_stride = 15, 7, 1
    ks, kt = space_filter_size, temp_filter_size
    S1 = (S - ks) // space_stride + 1      # conv1 output space = 6
    T1 = T - kt + 1                        # conv1 output time  = 6

    key = jax.random.PRNGKey(0)
    kx, kw1, kb1, kw2, kb2 = jax.random.split(key, 5)
    x = jax.random.normal(kx, (N, C, S, T), dtype=jnp.float32)
    bound1 = 1.0 / (C * ks * kt) ** 0.5            # PyTorch-style uniform init
    w1 = jax.random.uniform(kw1, (H, C, ks, kt), jnp.float32, -bound1, bound1)
    b1 = jax.random.uniform(kb1, (H,), jnp.float32, -bound1, bound1)
    bound2 = 1.0 / (H * S1 * T1) ** 0.5
    w2 = jax.random.uniform(kw2, (D_out, H, S1, T1), jnp.float32, -bound2, bound2)
    b2 = jax.random.uniform(kb2, (D_out,), jnp.float32, -bound2, bound2)

    y = cnn_2layer_forward(x, w1, b1, w2, b2,
                           space_stride=space_stride, use_bf16=True)
    y = jax.block_until_ready(y)
    assert y.shape == (N, D_out)

    # Tight check: identical math / identical bf16 operand rounding, but computed
    # with XLA convolutions (independently validates im2col + both contractions).
    ref_matched = _reference_forward(x, w1, b1, w2, b2, space_stride, True)
    assert jnp.allclose(y, ref_matched, atol=1e-3, rtol=1e-3), \
        "kernel mismatch vs precision-matched reference"

    # Loose check against the pure-f32 module semantics (only bf16 MXU rounding
    # noise expected; logic errors would be O(1)).
    ref_f32 = _reference_forward(x, w1, b1, w2, b2, space_stride, False)
    assert jnp.allclose(y, ref_f32, atol=5e-2, rtol=0.0), \
        "kernel mismatch vs f32 reference"

    print("KERNEL_OK")
</pallas_src>

<mosaic_0001>
module attributes {stable_mosaic.version = 11 : i64} {
  func.func @_cnn2_fused_kernel(%arg0: i32, %arg1: i32, %arg2: memref<1x8x420xbf16, #tpu.memory_space<vmem>>, %arg3: memref<128x420xbf16, #tpu.memory_space<vmem>>, %arg4: memref<1x128xf32, #tpu.memory_space<vmem>>, %arg5: memref<1x128x128xbf16, #tpu.memory_space<vmem>>, %arg6: memref<1x128xf32, #tpu.memory_space<vmem>>, %arg7: memref<8x128xf32, #tpu.memory_space<vmem>>, %arg8: memref<8x128xf32, #tpu.memory_space<vmem>>) attributes {dimension_semantics = [#tpu.dimension_semantics<parallel>, #tpu.dimension_semantics<arbitrary>], iteration_bounds = array<i64: 1, 36>, scalar_prefetch = 0 : i64, scratch_operands = 1 : i64, tpu.core_type = #tpu.core_type<tc>, window_params = [{transform_indices = @transform_0, window_bounds = array<i64: 1, 8, 420>}, {pipeline_mode = #tpu.pipeline_mode<synchronous>, transform_indices = @transform_1, window_bounds = array<i64: 128, 420>}, {pipeline_mode = #tpu.pipeline_mode<synchronous>, transform_indices = @transform_2, window_bounds = array<i64: 1, 128>}, {transform_indices = @transform_3, window_bounds = array<i64: 1, 128, 128>}, {pipeline_mode = #tpu.pipeline_mode<synchronous>, transform_indices = @transform_4, window_bounds = array<i64: 1, 128>}, {transform_indices = @transform_5, window_bounds = array<i64: 8, 128>}]} {
    %c0_i32 = arith.constant 0 : i32
    %0 = arith.cmpi eq, %arg1, %c0_i32 : i32
    %1 = arith.extui %0 : i1 to i32
    %c0_i32_0 = arith.constant 0 : i32
    %2 = arith.cmpi ne, %1, %c0_i32_0 : i32
    scf.if %2 {
      %cst_19 = arith.constant 0.000000e+00 : f32
      %30 = vector.broadcast %cst_19 : f32 to vector<8x128xf32>
      %c0_20 = arith.constant 0 : index
      %c0_21 = arith.constant 0 : index
      %31 = vector.load %arg8[%c0_20, %c0_21] : memref<8x128xf32, #tpu.memory_space<vmem>>, vector<8x128xf32>
      tpu.vector_store %arg8[%c0_20, %c0_21], %30 {strides = array<i32>} : memref<8x128xf32, #tpu.memory_space<vmem>>, vector<8x128xf32>,
    } else {
    }
    %c0 = arith.constant 0 : index
    %c0_1 = arith.constant 0 : index
    %c0_2 = arith.constant 0 : index
    %3 = vector.load %arg2[%c0, %c0_1, %c0_2] : memref<1x8x420xbf16, #tpu.memory_space<vmem>>, vector<1x8x420xbf16>
    %4 = vector.shape_cast %3 : vector<1x8x420xbf16> to vector<8x420xbf16>
    %c0_3 = arith.constant 0 : index
    %c0_4 = arith.constant 0 : index
    %5 = vector.load %arg3[%c0_3, %c0_4] : memref<128x420xbf16, #tpu.memory_space<vmem>>, vector<128x420xbf16>
    %cst = arith.constant dense<0.000000e+00> : vector<8x128xf32>
    %6 = tpu.matmul %4, %5, %cst {dimension_numbers = #tpu.dot_dimension_numbers<[1], [1], [0], [0], [0, 0, 1, 0], [], []>} : vector<8x420xbf16>, vector<128x420xbf16>, vector<8x128xf32> -> vector<8x128xf32>
    %c0_5 = arith.constant 0 : index
    %c0_6 = arith.constant 0 : index
    %7 = vector.load %arg4[%c0_5, %c0_6] : memref<1x128xf32, #tpu.memory_space<vmem>>, vector<1x128xf32>
    %8 = vector.broadcast %7 : vector<1x128xf32> to vector<8x128xf32>
    %9 = arith.addf %6, %8 : vector<8x128xf32>
    %cst_7 = arith.constant 0.000000e+00 : f32
    %10 = vector.broadcast %cst_7 : f32 to vector<8x128xf32>
    %11 = arith.maximumf %9, %10 : vector<8x128xf32>
    %12 = math.absf %9 : vector<8x128xf32>
    %cst_8 = arith.constant 0.000000e+00 : f32
    %13 = vector.broadcast %cst_8 : f32 to vector<8x128xf32>
    %14 = arith.subf %13, %12 : vector<8x128xf32>
    %15 = math.exp %14 : vector<8x128xf32>
    %cst_9 = arith.constant 1.000000e+00 : f32
    %16 = vector.broadcast %cst_9 : f32 to vector<8x128xf32>
    %17 = arith.addf %16, %15 : vector<8x128xf32>
    %18 = math.log %17 : vector<8x128xf32>
    %19 = arith.addf %11, %18 : vector<8x128xf32>
    %c0_10 = arith.constant 0 : index
    %c0_11 = arith.constant 0 : index
    %c0_12 = arith.constant 0 : index
    %20 = vector.load %arg5[%c0_10, %c0_11, %c0_12] : memref<1x128x128xbf16, #tpu.memory_space<vmem>>, vector<1x128x128xbf16>
    %21 = vector.shape_cast %20 : vector<1x128x128xbf16> to vector<128x128xbf16>
    %c0_13 = arith.constant 0 : index
    %c0_14 = arith.constant 0 : index
    %22 = vector.load %arg8[%c0_13, %c0_14] : memref<8x128xf32, #tpu.memory_space<vmem>>, vector<8x128xf32>
    %23 = arith.truncf %19 : vector<8x128xf32> to vector<8x128xbf16>
    %cst_15 = arith.constant dense<0.000000e+00> : vector<8x128xf32>
    %24 = tpu.matmul %23, %21, %cst_15 {dimension_numbers = #tpu.dot_dimension_numbers<[1], [0], [0], [1], [0, 0, 1, 1], [], []>} : vector<8x128xbf16>, vector<128x128xbf16>, vector<8x128xf32> -> vector<8x128xf32>
    %25 = arith.addf %22, %24 : vector<8x128xf32>
    %c0_16 = arith.constant 0 : index
    %c0_17 = arith.constant 0 : index
    %26 = vector.load %arg8[%c0_16, %c0_17] : memref<8x128xf32, #tpu.memory_space<vmem>>, vector<8x128xf32>
    tpu.vector_store %arg8[%c0_16, %c0_17], %25 {strides = array<i32>} : memref<8x128xf32, #tpu.memory_space<vmem>>, vector<8x128xf32>,
    %c35_i32 = arith.constant 35 : i32
    %27 = arith.cmpi eq, %arg1, %c35_i32 : i32
    %28 = arith.extui %27 : i1 to i32
    %c0_i32_18 = arith.constant 0 : i32
    %29 = arith.cmpi ne, %28, %c0_i32_18 : i32
    scf.if %29 {
      %c0_19 = arith.constant 0 : index
      %c0_20 = arith.constant 0 : index
      %30 = vector.load %arg8[%c0_19, %c0_20] : memref<8x128xf32, #tpu.memory_space<vmem>>, vector<8x128xf32>
      %c0_21 = arith.constant 0 : index
      %c0_22 = arith.constant 0 : index
      %31 = vector.load %arg6[%c0_21, %c0_22] : memref<1x128xf32, #tpu.memory_space<vmem>>, vector<1x128xf32>
      %32 = vector.broadcast %31 : vector<1x128xf32> to vector<8x128xf32>
      %33 = arith.addf %30, %32 : vector<8x128xf32>
      %34 = math.tanh %33 : vector<8x128xf32>
      %c0_23 = arith.constant 0 : index
      %c0_24 = arith.constant 0 : index
      %35 = vector.load %arg7[%c0_23, %c0_24] : memref<8x128xf32, #tpu.memory_space<vmem>>, vector<8x128xf32>
      tpu.vector_store %arg7[%c0_23, %c0_24], %34 {strides = array<i32>} : memref<8x128xf32, #tpu.memory_space<vmem>>, vector<8x128xf32>,
    } else {
    }
    return
  }
  func.func @transform_0(%arg0: i32, %arg1: i32) -> (i32, i32, i32) {
    %c0_i32 = arith.constant 0 : i32
    %c0_i32_0 = arith.constant 0 : i32
    return %arg1, %arg0, %c0_i32 : i32, i32, i32
  }
  func.func @transform_1(%arg0: i32, %arg1: i32) -> (i32, i32) {
    %c0_i32 = arith.constant 0 : i32
    %c0_i32_0 = arith.constant 0 : i32
    %c0_i32_1 = arith.constant 0 : i32
    return %c0_i32, %c0_i32_0 : i32, i32
  }
  func.func @transform_2(%arg0: i32, %arg1: i32) -> (i32, i32) {
    %c0_i32 = arith.constant 0 : i32
    %c0_i32_0 = arith.constant 0 : i32
    %c0_i32_1 = arith.constant 0 : i32
    return %c0_i32, %c0_i32_0 : i32, i32
  }
  func.func @transform_3(%arg0: i32, %arg1: i32) -> (i32, i32, i32) {
    %c0_i32 = arith.constant 0 : i32
    %c0_i32_0 = arith.constant 0 : i32
    %c0_i32_1 = arith.constant 0 : i32
    return %arg1, %c0_i32, %c0_i32_0 : i32, i32, i32
  }
  func.func @transform_4(%arg0: i32, %arg1: i32) -> (i32, i32) {
    %c0_i32 = arith.constant 0 : i32
    %c0_i32_0 = arith.constant 0 : i32
    %c0_i32_1 = arith.constant 0 : i32
    return %c0_i32, %c0_i32_0 : i32, i32
  }
  func.func @transform_5(%arg0: i32, %arg1: i32) -> (i32, i32) {
    %c0_i32 = arith.constant 0 : i32
    %c0_i32_0 = arith.constant 0 : i32
    return %arg0, %c0_i32 : i32, i32
  }
}

</mosaic_0001>

<llo_original>
// kernel: _cnn_2layer_forward_impl.1
$region0: #{_cnn_2layer_forward_impl.1}
  #allocation0 [shape = 'u32[]', space=smem, size = 0x4, offset = 0x4, fixed_abs, tag = 'smem constant byte address 0x4 - core index']
  #allocation1 [shape = 'u32[144,128]{1,0:T(1,128)}', space=vmem, size = 0x12000, scoped, tag = 'internal scratch']
  #allocation2 [shape = 'f32[8,128]{1,0:T(8,128)}', space=vmem, size = 0x1000, scoped, tag = 'scratch operand']
  %s0 = inlined_call_operand.vmem [shape: bf16[36,8,420], index: 0, kind: input, shape index: {}]
  %s1 = inlined_call_operand.vmem [shape: bf16[128,420], index: 1, kind: input, shape index: {}]
  %s2 = inlined_call_operand.vmem [shape: f32[1,128], index: 2, kind: input, shape index: {}]
  %s3 = inlined_call_operand.vmem [shape: bf16[36,128,128], index: 3, kind: input, shape index: {}]
  %s4 = inlined_call_operand.vmem [shape: f32[1,128], index: 4, kind: input, shape index: {}]
  %s5 = inlined_call_operand.vmem [shape: f32[8,128], index: 5, kind: output, shape index: {}]
  %s6 = sld [smem:[#allocation0]]
  $region61: #{_cnn_2layer_forward_impl.1} parent=0
    _
  %s8 = ssub.s32 1, %s6
  %s9 = scalar_select 0, %s8, %s6
  loop: start=0, step=1, limit=38
  $region2: #{_cnn_2layer_forward_impl.1} parent=0 // loop_pre_header
    _
  $region3: #{_cnn_2layer_forward_impl.1} parent=0 // loop_header
    %s11 = sphi 0, %s15
    %p12 = scmp.ge.s32.totalorder %s11, 38
    %s18 = sphi 0, %s30
    %s19 = sphi 0, %s26
    %s20 = sphi 0, %s18
    %s21 = sphi 0, %s19
    %s22 = sphi 0, %s20
    %s23 = sphi 0, %s21
    %s35 = sphi 0, %s37
    %s38 = sphi 0, %s35
    %s39 = sphi 0, %s38
    %s55 = sphi 0, %s39
    %s59 = sphi 0, %s59
    %s61 = sphi 0, %s59
    %s62 = sphi 0, %s61
    %s76 = sphi 0, %s62
    %s80 = sphi 0, %s80
    %s82 = sphi 0, %s80
    %s83 = sphi 0, %s82
    %s97 = sphi 0, %s83
    %s103 = sphi 0, %s105
    %s106 = sphi 0, %s103
    %s107 = sphi 0, %s106
    %s123 = sphi 0, %s107
    %s127 = sphi 0, %s127
    %s129 = sphi 0, %s127
    %s130 = sphi 0, %s129
    %s144 = sphi 0, %s130
    %s150 = sphi 0, %s152
    %s153 = sphi 0, %s150
    %s154 = sphi 0, %s153
    %s170 = sphi 0, %s154
  $region4: #{_cnn_2layer_forward_impl.1} parent=0 // loop_header_branch
    %14 = sbr.rel (%p12) target = $region8
  $region5: #{_cnn_2layer_forward_impl.1} parent=0 // loop_body
    %s16 = ssub.s32 %s11, 1
    %s17 = ssub.s32 %s11, 2
    %s24 = sadd.s32 1, %s19
    %p25 = scmp.ge.s32.totalorder %s24, 36
    %s26 = scalar_select %p25, 0, %s24
    %s27 = sadd.s32 1, %s18
    %s28 = scalar_select %p25, %s27, %s18
    %p29 = scmp.ge.s32.totalorder %s28, 1
    %s30 = scalar_select %p29, 0, %s28
    %s31 = ssub.s32 %s19, %s26
    %s32 = ssub.s32 %s18, %s30
    %s33 = sor.u32 %s31, %s32
    %p34 = scmp.eq.s32.totalorder %s33, 0
    %s36 = sadd.s32 %s35, 1
    %s37 = scalar_select %p34, %s35, %s36
    %p40 = pneg %p34
    %p41 = scmp.eq.s32.totalorder %s11, 35
    %p42 = por %p40, %p41
    %p43 = scmp.ne.s32.totalorder %s35, %s38
    %p44 = scmp.eq.s32.totalorder %s11, 0
    %p45 = por %p43, %p44
    %p46 = scmp.ne.s32.totalorder %s35, %s38
    %p47 = scmp.eq.s32.totalorder %s16, 35
    %p48 = por %p46, %p47
    %p49 = scmp.ne.s32.totalorder %s38, %s39
    %p50 = scmp.eq.s32.totalorder %s16, 0
    %p51 = por %p49, %p50
    %p52 = scmp.ne.s32.totalorder %s38, %s39
    %p53 = scmp.eq.s32.totalorder %s17, 35
    %p54 = por %p52, %p53
    %p56 = scmp.ne.s32.totalorder %s39, %s55
    %p57 = scmp.eq.s32.totalorder %s17, 0
    %p58 = por %p56, %p57
    %s60 = sadd.s32 %s59, 1
    %p63 = scmp.eq.s32.totalorder %s11, 35
    %p64 = scmp.ne.s32.totalorder %s59, %s61
    %p65 = scmp.eq.s32.totalorder %s11, 0
    %p66 = por %p64, %p65
    %p67 = scmp.ne.s32.totalorder %s59, %s61
    %p68 = scmp.eq.s32.totalorder %s16, 35
    %p69 = por %p67, %p68
    %p70 = scmp.ne.s32.totalorder %s61, %s62
    %p71 = scmp.eq.s32.totalorder %s16, 0
    %p72 = por %p70, %p71
    %p73 = scmp.ne.s32.totalorder %s61, %s62
    %p74 = scmp.eq.s32.totalorder %s17, 35
    %p75 = por %p73, %p74
    %p77 = scmp.ne.s32.totalorder %s62, %s76
    %p78 = scmp.eq.s32.totalorder %s17, 0
    %p79 = por %p77, %p78
    %s81 = sadd.s32 %s80, 1
    %p84 = scmp.eq.s32.totalorder %s11, 35
    %p85 = scmp.ne.s32.totalorder %s80, %s82
    %p86 = scmp.eq.s32.totalorder %s11, 0
    %p87 = por %p85, %p86
    %p88 = scmp.ne.s32.totalorder %s80, %s82
    %p89 = scmp.eq.s32.totalorder %s16, 35
    %p90 = por %p88, %p89
    %p91 = scmp.ne.s32.totalorder %s82, %s83
    %p92 = scmp.eq.s32.totalorder %s16, 0
    %p93 = por %p91, %p92
    %p94 = scmp.ne.s32.totalorder %s82, %s83
    %p95 = scmp.eq.s32.totalorder %s17, 35
    %p96 = por %p94, %p95
    %p98 = scmp.ne.s32.totalorder %s83, %s97
    %p99 = scmp.eq.s32.totalorder %s17, 0
    %p100 = por %p98, %p99
    %s101 = ssub.s32 %s19, %s26
    %p102 = scmp.eq.s32.totalorder %s101, 0
    %s104 = sadd.s32 %s103, 1
    %s105 = scalar_select %p102, %s103, %s104
    %p108 = pneg %p102
    %p109 = scmp.eq.s32.totalorder %s11, 35
    %p110 = por %p108, %p109
    %p111 = scmp.ne.s32.totalorder %s103, %s106
    %p112 = scmp.eq.s32.totalorder %s11, 0
    %p113 = por %p111, %p112
    %p114 = scmp.ne.s32.totalorder %s103, %s106
    %p115 = scmp.eq.s32.totalorder %s16, 35
    %p116 = por %p114, %p115
    %p117 = scmp.ne.s32.totalorder %s106, %s107
    %p118 = scmp.eq.s32.totalorder %s16, 0
    %p119 = por %p117, %p118
    %p120 = scmp.ne.s32.totalorder %s106, %s107
    %p121 = scmp.eq.s32.totalorder %s17, 35
    %p122 = por %p120, %p121
    %p124 = scmp.ne.s32.totalorder %s107, %s123
    %p125 = scmp.eq.s32.totalorder %s17, 0
    %p126 = por %p124, %p125
    %s128 = sadd.s32 %s127, 1
    %p131 = scmp.eq.s32.totalorder %s11, 35
    %p132 = scmp.ne.s32.totalorder %s127, %s129
    %p133 = scmp.eq.s32.totalorder %s11, 0
    %p134 = por %p132, %p133
    %p135 = scmp.ne.s32.totalorder %s127, %s129
    %p136 = scmp.eq.s32.totalorder %s16, 35
    %p137 = por %p135, %p136
    %p138 = scmp.ne.s32.totalorder %s129, %s130
    %p139 = scmp.eq.s32.totalorder %s16, 0
    %p140 = por %p138, %p139
    %p141 = scmp.ne.s32.totalorder %s129, %s130
    %p142 = scmp.eq.s32.totalorder %s17, 35
    %p143 = por %p141, %p142
    %p145 = scmp.ne.s32.totalorder %s130, %s144
    %p146 = scmp.eq.s32.totalorder %s17, 0
    %p147 = por %p145, %p146
    %s148 = ssub.s32 %s18, %s30
    %p149 = scmp.eq.s32.totalorder %s148, 0
    %s151 = sadd.s32 %s150, 1
    %s152 = scalar_select %p149, %s150, %s151
    %p155 = pneg %p149
    %p156 = scmp.eq.s32.totalorder %s11, 35
    %p157 = por %p155, %p156
    %p158 = scmp.ne.s32.totalorder %s150, %s153
    %p159 = scmp.eq.s32.totalorder %s11, 0
    %p160 = por %p158, %p159
    %p161 = scmp.ne.s32.totalorder %s150, %s153
    %p162 = scmp.eq.s32.totalorder %s16, 35
    %p163 = por %p161, %p162
    %p164 = scmp.ne.s32.totalorder %s153, %s154
    %p165 = scmp.eq.s32.totalorder %s16, 0
    %p166 = por %p164, %p165
    %p167 = scmp.ne.s32.totalorder %s153, %s154
    %p168 = scmp.eq.s32.totalorder %s17, 35
    %p169 = por %p167, %p168
    %p171 = scmp.ne.s32.totalorder %s154, %s170
    %p172 = scmp.eq.s32.totalorder %s17, 0
    %p173 = por %p171, %p172
    %p174 = scmp.le.s32.totalorder 1, %s11
    %p175 = scmp.lt.s32.totalorder %s11, 37
    %p176 = pnand %p174, %p175
    %p177 = pneg %p176
    // Predicated region
    $region9: #{_cnn_2layer_forward_impl.1} parent=5 // pred_check
      _
    $region10: #{_cnn_2layer_forward_impl.1} parent=5 // pred_check_branch
      %179 = sbr.rel (%p176) target = $region12
    $region11: #{_cnn_2layer_forward_impl.1} parent=5 // pred_region
      %s180 = ssub.s32 %s11, 1
      // Predicated region
      $region13: #{_cnn_2layer_forward_impl.1} parent=11 // pred_check
        %p181 = pneg %p72
      $region14: #{_cnn_2layer_forward_impl.1} parent=11 // pred_check_branch
        %183 = sbr.rel (%p181) target = $region16
      $region15: #{_cnn_2layer_forward_impl.1} parent=11 // pred_region
        _
      $region16: #{_cnn_2layer_forward_impl.1} parent=11 // pred_fallthru
        _
      // Predicated region
      $region17: #{_cnn_2layer_forward_impl.1} parent=11 // pred_check
        %p184 = pneg %p93
      $region18: #{_cnn_2layer_forward_impl.1} parent=11 // pred_check_branch
        %186 = sbr.rel (%p184) target = $region20
      $region19: #{_cnn_2layer_forward_impl.1} parent=11 // pred_region
        _
      $region20: #{_cnn_2layer_forward_impl.1} parent=11 // pred_fallthru
        _
      // Predicated region
      $region21: #{_cnn_2layer_forward_impl.1} parent=11 // pred_check
        %p187 = pneg %p140
      $region22: #{_cnn_2layer_forward_impl.1} parent=11 // pred_check_branch
        %189 = sbr.rel (%p187) target = $region24
      $region23: #{_cnn_2layer_forward_impl.1} parent=11 // pred_region
        _
      $region24: #{_cnn_2layer_forward_impl.1} parent=11 // pred_fallthru
        _
    $region12: #{_cnn_2layer_forward_impl.1} parent=5 // pred_fallthru
      _
    %p190 = scmp.lt.s32.totalorder %s11, 36
    // Predicated region
    $region25: #{_cnn_2layer_forward_impl.1} parent=5 // pred_check
      %p191 = pneg %p190
    $region26: #{_cnn_2layer_forward_impl.1} parent=5 // pred_check_branch
      %193 = sbr.rel (%p191) target = $region28
    $region27: #{_cnn_2layer_forward_impl.1} parent=5 // pred_region
      // Predicated region
      $region29: #{_cnn_2layer_forward_impl.1} parent=27 // pred_check
        %p194 = pneg %p45
      $region30: #{_cnn_2layer_forward_impl.1} parent=27 // pred_check_branch
        %196 = sbr.rel (%p194) target = $region32
      $region31: #{_cnn_2layer_forward_impl.1} parent=27 // pred_region
        %p197 = scmp.lt.s32.totalorder %s19, 35
        %s198 = scalar_select %p197, %s19, 35
        %p199 = scmp.lt.s32.totalorder %s18, 0
        %s200 = scalar_select %p199, %s18, 0
        %s201 = smul.addr %s200, 4
        %s202 = smul.addr %s198, 4
        %s203 = sadd.s32 %s201, %s202
        %s204 = smul.addr %s203, 4
        %s205 = scalar_lea.vmem %s0, %s204
      $region32: #{_cnn_2layer_forward_impl.1} parent=27 // pred_fallthru
        _
      // Predicated region
      $region33: #{_cnn_2layer_forward_impl.1} parent=27 // pred_check
        %p206 = pneg %p113
      $region34: #{_cnn_2layer_forward_impl.1} parent=27 // pred_check_branch
        %208 = sbr.rel (%p206) target = $region36
      $region35: #{_cnn_2layer_forward_impl.1} parent=27 // pred_region
        %p209 = scmp.lt.s32.totalorder %s19, 35
        %s210 = scalar_select %p209, %s19, 35
        %s211 = smul.addr %s210, 16
        %s212 = smul.addr %s211, 4
        %s213 = scalar_lea.vmem %s3, %s212
      $region36: #{_cnn_2layer_forward_impl.1} parent=27 // pred_fallthru
        _
    $region28: #{_cnn_2layer_forward_impl.1} parent=5 // pred_fallthru
      _
    %p214 = scmp.le.s32.totalorder 1, %s11
    %p215 = scmp.lt.s32.totalorder %s11, 37
    %p216 = pnand %p214, %p215
    %p217 = pneg %p216
    // Predicated region
    $region37: #{_cnn_2layer_forward_impl.1} parent=5 // pred_check
      _
    $region38: #{_cnn_2layer_forward_impl.1} parent=5 // pred_check_branch
      %219 = sbr.rel (%p216) target = $region40
    $region39: #{_cnn_2layer_forward_impl.1} parent=5 // pred_region
      %s220 = ssub.s32 %s11, 1
      %p221 = scmp.lt.s32.totalorder %s21, 35
      %s222 = scalar_select %p221, %s21, 35
      %p223 = scmp.lt.s32.totalorder %s20, 0
      %s224 = scalar_select %p223, %s20, 0
      %s225 = smul.addr %s224, 4
      %s226 = smul.addr %s222, 4
      %s227 = sadd.s32 %s225, %s226
      %s228 = smul.addr %s227, 4
      %s229 = scalar_lea.vmem %s0, %s228
      %p230 = pneg %p51
      %p231 = pneg %p48
      %p232 = pneg %p72
      %p233 = pneg %p69
      %p234 = pneg %p93
      %p235 = pneg %p90
      %p236 = scmp.lt.s32.totalorder %s21, 35
      %s237 = scalar_select %p236, %s21, 35
      %s238 = smul.addr %s237, 16
      %s239 = smul.addr %s238, 4
      %s240 = scalar_lea.vmem %s3, %s239
      %p241 = pneg %p119
      %p242 = pneg %p116
      %p243 = pneg %p140
      %p244 = pneg %p137
      %p245 = pneg %p166
      %p246 = pneg %p163
      %p247 = scmp.lt.s32.totalorder %s20, 0
      %s248 = scalar_select %p247, %s20, 0
      %s249 = smul.addr %s248, 8
      %s250 = scalar_lea.vmem %s5, %s249
      %p251 = scmp.lt.s32.totalorder %s21, 35
      %s252 = scalar_select %p251, %s21, 35
      %p253 = scmp.lt.s32.totalorder %s20, 0
      %s254 = scalar_select %p253, %s20, 0
      %s255 = smul.addr %s254, 4
      %s256 = smul.addr %s252, 4
      %s257 = sadd.s32 %s255, %s256
      %s258 = smul.addr %s257, 4
      %s259 = scalar_lea.vmem %s0, %s258
      %p260 = scmp.lt.s32.totalorder %s21, 35
      %s261 = scalar_select %p260, %s21, 35
      %s262 = smul.addr %s261, 16
      %s263 = smul.addr %s262, 4
      %s264 = scalar_lea.vmem %s3, %s263
      %p265 = scmp.lt.s32.totalorder %s20, 0
      %s266 = scalar_select %p265, %s20, 0
      %s267 = smul.addr %s266, 8
      %s268 = scalar_lea.vmem %s5, %s267
      %p270 = scmp.eq.s32.totalorder %s21, 0
      // Predicated region
      $region41: #{_cnn_2layer_forward_impl.1} parent=39 // pred_check
        %p271 = pneg %p270
      $region42: #{_cnn_2layer_forward_impl.1} parent=39 // pred_check_branch
        %273 = sbr.rel (%p271) target = $region44
      $region43: #{_cnn_2layer_forward_impl.1} parent=39 // pred_region
        %274 = vst [vmem:[#allocation2] sm:$0xff] 0.0
      $region44: #{_cnn_2layer_forward_impl.1} parent=39 // pred_fallthru
        _
      %v275 = vld [vmem:[%s259] sm:$0xff]
      %v276 = vld [vmem:[%s259 + $0x8] sm:$0xff]
      %v277 = vld [vmem:[%s1] sm:$0xff]
      %v278 = vld [vmem:[%s1 + $0x8] sm:$0xff]
      %v279 = vld [vmem:[%s1 + $0x10] sm:$0xff]
      %v280 = vld [vmem:[%s1 + $0x18] sm:$0xff]
      %v281 = vld [vmem:[%s1 + $0x20] sm:$0xff]
      %v282 = vld [vmem:[%s1 + $0x28] sm:$0xff]
      %v283 = vld [vmem:[%s1 + $0x30] sm:$0xff]
      %v284 = vld [vmem:[%s1 + $0x38] sm:$0xff]
      %v285 = vld [vmem:[%s1 + $0x40] sm:$0xff]
      %v286 = vld [vmem:[%s1 + $0x48] sm:$0xff]
      %v287 = vld [vmem:[%s1 + $0x50] sm:$0xff]
      %v288 = vld [vmem:[%s1 + $0x58] sm:$0xff]
      %v289 = vld [vmem:[%s1 + $0x60] sm:$0xff]
      %v290 = vld [vmem:[%s1 + $0x68] sm:$0xff]
      %v291 = vld [vmem:[%s1 + $0x70] sm:$0xff]
      %v292 = vld [vmem:[%s1 + $0x78] sm:$0xff]
      %v293 = vld [vmem:[%s1 + $0x80] sm:$0xff]
      %v294 = vld [vmem:[%s1 + $0x88] sm:$0xff]
      %v295 = vld [vmem:[%s1 + $0x90] sm:$0xff]
      %v296 = vld [vmem:[%s1 + $0x98] sm:$0xff]
      %v297 = vld [vmem:[%s1 + $0xa0] sm:$0xff]
      %v298 = vld [vmem:[%s1 + $0xa8] sm:$0xff]
      %v299 = vld [vmem:[%s1 + $0xb0] sm:$0xff]
      %v300 = vld [vmem:[%s1 + $0xb8] sm:$0xff]
      %v301 = vld [vmem:[%s1 + $0xc0] sm:$0xff]
      %v302 = vld [vmem:[%s1 + $0xc8] sm:$0xff]
      %v303 = vld [vmem:[%s1 + $0xd0] sm:$0xff]
      %v304 = vld [vmem:[%s1 + $0xd8] sm:$0xff]
      %v305 = vld [vmem:[%s1 + $0xe0] sm:$0xff]
      %v306 = vld [vmem:[%s1 + $0xe8] sm:$0xff]
      %v307 = vld [vmem:[%s1 + $0xf0] sm:$0xff]
      %v308 = vld [vmem:[%s1 + $0xf8] sm:$0xff]
      %v309 = vld [vmem:[%s2] sm:$0x1]
      %v311 = vlaneseq
      %v312 = vshrl.u32 %v311, 7
      %v313 = vsub.s32 0, %v312
      %v314 = vrot.slane %v309, %v313
      %v318 = vunpack.c.l.b16 %v275
      %v319 = vunpack.c.h.b16 %v275
      %v320 = vunpack.c.l.b16 %v276
      %v321 = vunpack.c.h.b16 %v276
      %v322 = vpack.c.b16 %v318, %v318
      %v323 = vpack.c.b16 %v319, %v319
      %v324 = vpack.c.b16 %v320, %v320
      %v325 = vpack.c.b16 %v321, %v321
      %v361 = vunpack.c.l.b16 %v277
      %v362 = vunpack.c.h.b16 %v277
      %v363 = vunpack.c.l.b16 %v278
      %v364 = vunpack.c.h.b16 %v278
      %v365 = vunpack.c.l.b16 %v279
      %v366 = vunpack.c.h.b16 %v279
      %v367 = vunpack.c.l.b16 %v280
      %v368 = vunpack.c.h.b16 %v280
      %v369 = vunpack.c.l.b16 %v281
      %v370 = vunpack.c.h.b16 %v281
      %v371 = vunpack.c.l.b16 %v282
      %v372 = vunpack.c.h.b16 %v282
      %v373 = vunpack.c.l.b16 %v283
      %v374 = vunpack.c.h.b16 %v283
      %v375 = vunpack.c.l.b16 %v284
      %v376 = vunpack.c.h.b16 %v284
      %v377 = vunpack.c.l.b16 %v285
      %v378 = vunpack.c.h.b16 %v285
      %v379 = vunpack.c.l.b16 %v286
      %v380 = vunpack.c.h.b16 %v286
      %v381 = vunpack.c.l.b16 %v287
      %v382 = vunpack.c.h.b16 %v287
      %v383 = vunpack.c.l.b16 %v288
      %v384 = vunpack.c.h.b16 %v288
      %v385 = vunpack.c.l.b16 %v289
      %v386 = vunpack.c.h.b16 %v289
      %v387 = vunpack.c.l.b16 %v290
      %v388 = vunpack.c.h.b16 %v290
      %v389 = vunpack.c.l.b16 %v291
      %v390 = vunpack.c.h.b16 %v291
      %v391 = vunpack.c.l.b16 %v292
      %v392 = vunpack.c.h.b16 %v292
      %v393 = vunpack.c.l.b16 %v293
      %v394 = vunpack.c.h.b16 %v293
      %v395 = vunpack.c.l.b16 %v294
      %v396 = vunpack.c.h.b16 %v294
      %v397 = vunpack.c.l.b16 %v295
      %v398 = vunpack.c.h.b16 %v295
      %v399 = vunpack.c.l.b16 %v296
      %v400 = vunpack.c.h.b16 %v296
      %v401 = vunpack.c.l.b16 %v297
      %v402 = vunpack.c.h.b16 %v297
      %v403 = vunpack.c.l.b16 %v298
      %v404 = vunpack.c.h.b16 %v298
      %v405 = vunpack.c.l.b16 %v299
      %v406 = vunpack.c.h.b16 %v299
      %v407 = vunpack.c.l.b16 %v300
      %v408 = vunpack.c.h.b16 %v300
      %v409 = vunpack.c.l.b16 %v301
      %v410 = vunpack.c.h.b16 %v301
      %v411 = vunpack.c.l.b16 %v302
      %v412 = vunpack.c.h.b16 %v302
      %v413 = vunpack.c.l.b16 %v303
      %v414 = vunpack.c.h.b16 %v303
      %v415 = vunpack.c.l.b16 %v304
      %v416 = vunpack.c.h.b16 %v304
      %v417 = vunpack.c.l.b16 %v305
      %v418 = vunpack.c.h.b16 %v305
      %v419 = vunpack.c.l.b16 %v306
      %v420 = vunpack.c.h.b16 %v306
      %v421 = vunpack.c.l.b16 %v307
      %v422 = vunpack.c.h.b16 %v307
      %v423 = vunpack.c.l.b16 %v308
      %v424 = vunpack.c.h.b16 %v308
      %v425 = vpack.c.b16 %v365, %v361
      %v426 = vpack.c.b16 %v366, %v362
      %v427 = vpack.c.b16 %v367, %v363
      %v428 = vpack.c.b16 %v368, %v364
      %v429 = vpack.c.b16 %v373, %v369
      %v430 = vpack.c.b16 %v374, %v370
      %v431 = vpack.c.b16 %v375, %v371
      %v432 = vpack.c.b16 %v376, %v372
      %v433 = vpack.c.b16 %v381, %v377
      %v434 = vpack.c.b16 %v382, %v378
      %v435 = vpack.c.b16 %v383, %v379
      %v436 = vpack.c.b16 %v384, %v380
      %v437 = vpack.c.b16 %v389, %v385
      %v438 = vpack.c.b16 %v390, %v386
      %v439 = vpack.c.b16 %v391, %v387
      %v440 = vpack.c.b16 %v392, %v388
      %v441 = vpack.c.b16 %v397, %v393
      %v442 = vpack.c.b16 %v398, %v394
      %v443 = vpack.c.b16 %v399, %v395
      %v444 = vpack.c.b16 %v400, %v396
      %v445 = vpack.c.b16 %v405, %v401
      %v446 = vpack.c.b16 %v406, %v402
      %v447 = vpack.c.b16 %v407, %v403
      %v448 = vpack.c.b16 %v408, %v404
      %v449 = vpack.c.b16 %v413, %v409
      %v450 = vpack.c.b16 %v414, %v410
      %v451 = vpack.c.b16 %v415, %v411
      %v452 = vpack.c.b16 %v416, %v412
      %v453 = vpack.c.b16 %v421, %v417
      %v454 = vpack.c.b16 %v422, %v418
      %v455 = vpack.c.b16 %v423, %v419
      %v456 = vpack.c.b16 %v424, %v420
      %vm481 = vcmask 293888
      %v483 = vsel %vm481, %v325, 0
      %v486 = vsel %vm481, %v428, 0
      %v489 = vsel %vm481, %v432, 0
      %v492 = vsel %vm481, %v436, 0
      %v495 = vsel %vm481, %v440, 0
      %v498 = vsel %vm481, %v444, 0
      %v501 = vsel %vm481, %v448, 0
      %v504 = vsel %vm481, %v452, 0
      %v507 = vsel %vm481, %v456, 0
      %509 = vmatprep.subr.bf16.mxu0 %v454
      %510 = vmatpush1.bf16.xpose.msra.mxu0 %v453
      %511 = vmatprep.subr.bf16.mxu0 %v450
      %512 = vmatpush1.bf16.xpose.msra.mxu0 %v449
      %513 = vmatprep.subr.bf16.mxu0 %v446
      %514 = vmatpush1.bf16.xpose.msra.mxu0 %v445
      %515 = vmatprep.subr.bf16.mxu0 %v442
      %516 = vmatpush1.bf16.xpose.msra.mxu0 %v441
      %517 = vmatprep.subr.bf16.mxu0 %v438
      %518 = vmatpush1.bf16.xpose.msra.mxu0 %v437
      %519 = vmatprep.subr.bf16.mxu0 %v434
      %520 = vmatpush1.bf16.xpose.msra.mxu0 %v433
      %521 = vmatprep.subr.bf16.mxu0 %v430
      %522 = vmatpush1.bf16.xpose.msra.mxu0 %v429
      %523 = vmatprep.subr.bf16.mxu0 %v426
      %524 = vmatpush1.bf16.xpose.msra.mxu0 %v425
      %525 = vmatprep.subr.bf16.mxu0 0
      %526 = vmatpush2.bf16.xpose.msra.mxu0 0
      %527 = vmatprep.subr.bf16.mxu0 0
      %528 = vmatpush2.bf16.xpose.msra.mxu0 0
      %529 = vmatprep.subr.bf16.mxu0 0
      %530 = vmatpush2.bf16.xpose.msra.mxu0 0
      %531 = vmatprep.subr.bf16.mxu0 0
      %532 = vmatpush2.bf16.xpose.msra.mxu0 0
      %533 = vmatprep.subr.bf16.mxu0 0
      %534 = vmatpush2.bf16.xpose.msra.mxu0 0
      %535 = vmatprep.subr.bf16.mxu0 0
      %536 = vmatpush2.bf16.xpose.msra.mxu0 0
      %537 = vmatprep.subr.bf16.mxu0 0
      %538 = vmatpush2.bf16.xpose.msra.mxu0 0
      %539 = vmatprep.subr.bf16.mxu0 0
      %540 = vmatpush2.bf16.xpose.msra.mxu0 0
      %541 = vmatprep.mubr.bf16.mxu0 %v323
      %542 = vmatmul.mubr.bf16.gmra.mxu0 %v322
      %v543 = vpop.f32.mrf.mxu0
      %v544 = vadd.f32 %v314, %v543
      %v545 = vpop.f32.mrf.mxu0
      %v546 = vpop.f32.mrf.mxu0
      %v547 = vpop.f32.mrf.mxu0
      %548 = vdwg.mxu0
      %549 = vmatprep.subr.bf16.mxu0 %v507
      %550 = vmatpush1.bf16.xpose.msra.mxu0 %v455
      %551 = vmatprep.subr.bf16.mxu0 %v504
      %552 = vmatpush1.bf16.xpose.msra.mxu0 %v451
      %553 = vmatprep.subr.bf16.mxu0 %v501
      %554 = vmatpush1.bf16.xpose.msra.mxu0 %v447
      %555 = vmatprep.subr.bf16.mxu0 %v498
      %556 = vmatpush1.bf16.xpose.msra.mxu0 %v443
      %557 = vmatprep.subr.bf16.mxu0 %v495
      %558 = vmatpush1.bf16.xpose.msra.mxu0 %v439
      %559 = vmatprep.subr.bf16.mxu0 %v492
      %560 = vmatpush1.bf16.xpose.msra.mxu0 %v435
      %561 = vmatprep.subr.bf16.mxu0 %v489
      %562 = vmatpush1.bf16.xpose.msra.mxu0 %v431
      %563 = vmatprep.subr.bf16.mxu0 %v486
      %564 = vmatpush1.bf16.xpose.msra.mxu0 %v427
      %565 = vmatprep.subr.bf16.mxu0 0
      %566 = vmatpush2.bf16.xpose.msra.mxu0 0
      %567 = vmatprep.subr.bf16.mxu0 0
      %568 = vmatpush2.bf16.xpose.msra.mxu0 0
      %569 = vmatprep.subr.bf16.mxu0 0
      %570 = vmatpush2.bf16.xpose.msra.mxu0 0
      %571 = vmatprep.subr.bf16.mxu0 0
      %572 = vmatpush2.bf16.xpose.msra.mxu0 0
      %573 = vmatprep.subr.bf16.mxu0 0
      %574 = vmatpush2.bf16.xpose.msra.mxu0 0
      %575 = vmatprep.subr.bf16.mxu0 0
      %576 = vmatpush2.bf16.xpose.msra.mxu0 0
      %577 = vmatprep.subr.bf16.mxu0 0
      %578 = vmatpush2.bf16.xpose.msra.mxu0 0
      %579 = vmatprep.subr.bf16.mxu0 0
      %580 = vmatpush2.bf16.xpose.msra.mxu0 0
      %581 = vmatprep.mubr.bf16.mxu0 %v483
      %582 = vmatmul.mubr.bf16.gmra.mxu0 %v324
      %v583 = vpop.f32.mrf.mxu0
      %v584 = vadd.f32 %v544, %v583
      %v585 = vpop.f32.mrf.mxu0
      %v586 = vpop.f32.mrf.mxu0
      %v587 = vpop.f32.mrf.mxu0
      %588 = vdwg.mxu0
      %v589 = vmax.f32 %v584, 0.0
      %v590 = vand.u32 2147483647, %v584
      %v591 = vsub.f32 0.0, %v590
      %v592 = vmul.f32 %v591, 1.442695
      %v593 = vpow.pop %v592
      %v594 = vadd.f32 %v593, 1.0
      %v595 = vlog2.pop %v594
      %v596 = vmul.f32 %v595, 0.6931472
      %v597 = vadd.f32 %v589, %v596
      %v598 = vld [vmem:[%s264] sm:$0xf]
      %v599 = vld [vmem:[%s264 + $0x4] sm:$0xf]
      %v600 = vld [vmem:[%s264 + $0x8] sm:$0xf]
      %v601 = vld [vmem:[%s264 + $0xc] sm:$0xf]
      %v602 = vld [vmem:[%s264 + $0x10] sm:$0xf]
      %v603 = vld [vmem:[%s264 + $0x14] sm:$0xf]
      %v604 = vld [vmem:[%s264 + $0x18] sm:$0xf]
      %v605 = vld [vmem:[%s264 + $0x1c] sm:$0xf]
      %v606 = vld [vmem:[%s264 + $0x20] sm:$0xf]
      %v607 = vld [vmem:[%s264 + $0x24] sm:$0xf]
      %v608 = vld [vmem:[%s264 + $0x28] sm:$0xf]
      %v609 = vld [vmem:[%s264 + $0x2c] sm:$0xf]
      %v610 = vld [vmem:[%s264 + $0x30] sm:$0xf]
      %v611 = vld [vmem:[%s264 + $0x34] sm:$0xf]
      %v612 = vld [vmem:[%s264 + $0x38] sm:$0xf]
      %v613 = vld [vmem:[%s264 + $0x3c] sm:$0xf]
      %v614 = vld [vmem:[#allocation2] sm:$0xff]
      %v615 = vpack.c.bf16 %v597, %v597
      %v632 = vunpack.c.l.b16 %v598
      %v633 = vunpack.c.l.b16 %v599
      %v634 = vunpack.c.l.b16 %v600
      %v635 = vunpack.c.l.b16 %v601
      %v636 = vunpack.c.l.b16 %v602
      %v637 = vunpack.c.l.b16 %v603
      %v638 = vunpack.c.l.b16 %v604
      %v639 = vunpack.c.l.b16 %v605
      %v640 = vunpack.c.l.b16 %v606
      %v641 = vunpack.c.l.b16 %v607
      %v642 = vunpack.c.l.b16 %v608
      %v643 = vunpack.c.l.b16 %v609
      %v644 = vunpack.c.l.b16 %v610
      %v645 = vunpack.c.l.b16 %v611
      %v646 = vunpack.c.l.b16 %v612
      %v647 = vunpack.c.l.b16 %v613
      %v648 = vpack.c.b16 %v633, %v632
      %v649 = vpack.c.b16 %v635, %v634
      %v650 = vpack.c.b16 %v637, %v636
      %v651 = vpack.c.b16 %v639, %v638
      %v652 = vpack.c.b16 %v641, %v640
      %v653 = vpack.c.b16 %v643, %v642
      %v654 = vpack.c.b16 %v645, %v644
      %v655 = vpack.c.b16 %v647, %v646
      %664 = vmatprep.subr.bf16.mxu0 0
      %665 = vmatpush1.bf16.msra.mxu0 %v655
      %666 = vmatprep.subr.bf16.mxu0 0
      %667 = vmatpush1.bf16.msra.mxu0 %v654
      %668 = vmatprep.subr.bf16.mxu0 0
      %669 = vmatpush1.bf16.msra.mxu0 %v653
      %670 = vmatprep.subr.bf16.mxu0 0
      %671 = vmatpush1.bf16.msra.mxu0 %v652
      %672 = vmatprep.subr.bf16.mxu0 0
      %673 = vmatpush1.bf16.msra.mxu0 %v651
      %674 = vmatprep.subr.bf16.mxu0 0
      %675 = vmatpush1.bf16.msra.mxu0 %v650
      %676 = vmatprep.subr.bf16.mxu0 0
      %677 = vmatpush1.bf16.msra.mxu0 %v649
      %678 = vmatprep.subr.bf16.mxu0 0
      %679 = vmatpush1.bf16.msra.mxu0 %v648
      %680 = vmatprep.subr.bf16.mxu0 0
      %681 = vmatpush2.bf16.msra.mxu0 0
      %682 = vmatprep.subr.bf16.mxu0 0
      %683 = vmatpush2.bf16.msra.mxu0 0
      %684 = vmatprep.subr.bf16.mxu0 0
      %685 = vmatpush2.bf16.msra.mxu0 0
      %686 = vmatprep.subr.bf16.mxu0 0
      %687 = vmatpush2.bf16.msra.mxu0 0
      %688 = vmatprep.subr.bf16.mxu0 0
      %689 = vmatpush2.bf16.msra.mxu0 0
      %690 = vmatprep.subr.bf16.mxu0 0
      %691 = vmatpush2.bf16.msra.mxu0 0
      %692 = vmatprep.subr.bf16.mxu0 0
      %693 = vmatpush2.bf16.msra.mxu0 0
      %694 = vmatprep.subr.bf16.mxu0 0
      %695 = vmatpush2.bf16.msra.mxu0 0
      %696 = vmatprep.mubr.bf16.mxu0 0
      %697 = vmatmul.mubr.bf16.gmra.mxu0 %v615
      %v698 = vpop.f32.mrf.mxu0
      %v699 = vadd.f32 0.0, %v698
      %v700 = vpop.f32.mrf.mxu0
      %v701 = vpop.f32.mrf.mxu0
      %v702 = vpop.f32.mrf.mxu0
      %703 = vdwg.mxu0
      %v704 = vadd.f32 %v614, %v699
      %705 = vst [vmem:[#allocation2] sm:$0xff] %v704
      %p706 = scmp.eq.s32.totalorder %s21, 35
      // Predicated region
      $region45: #{_cnn_2layer_forward_impl.1} parent=39 // pred_check
        %p707 = pneg %p706
      $region46: #{_cnn_2layer_forward_impl.1} parent=39 // pred_check_branch
        %709 = sbr.rel (%p707) target = $region48
      $region47: #{_cnn_2layer_forward_impl.1} parent=39 // pred_region
        %v710 = vld [vmem:[#allocation2] sm:$0xff]
        %v711 = vld [vmem:[%s4] sm:$0x1]
        %v713 = vlaneseq
        %v714 = vshrl.u32 %v713, 7
        %v715 = vsub.s32 0, %v714
        %v716 = vrot.slane %v711, %v715
        %v718 = vadd.f32 %v710, %v716
        %v719 = vtanh.pop %v718
        %720 = vst [vmem:[%s268] sm:$0xff] %v719
      $region48: #{_cnn_2layer_forward_impl.1} parent=39 // pred_fallthru
        _
      %p721 = scmp.lt.s32.totalorder %s20, 0
      %s722 = scalar_select %p721, %s20, 0
      %s723 = smul.addr %s722, 8
      %s724 = scalar_lea.vmem %s5, %s723
      // Predicated region
      $region49: #{_cnn_2layer_forward_impl.1} parent=39 // pred_check
        %p725 = pneg %p163
      $region50: #{_cnn_2layer_forward_impl.1} parent=39 // pred_check_branch
        %727 = sbr.rel (%p725) target = $region52
      $region51: #{_cnn_2layer_forward_impl.1} parent=39 // pred_region
        _
      $region52: #{_cnn_2layer_forward_impl.1} parent=39 // pred_fallthru
        _
      // Predicated region
      $region53: #{_cnn_2layer_forward_impl.1} parent=39 // pred_check
        %p728 = pneg %p163
      $region54: #{_cnn_2layer_forward_impl.1} parent=39 // pred_check_branch
        %730 = sbr.rel (%p728) target = $region56
      $region55: #{_cnn_2layer_forward_impl.1} parent=39 // pred_region
        %p731 = scmp.lt.s32.totalorder %s20, 0
        %s732 = scalar_select %p731, %s20, 0
        %s733 = smul.addr %s732, 8
        %s734 = scalar_lea.vmem %s5, %s733
      $region56: #{_cnn_2layer_forward_impl.1} parent=39 // pred_fallthru
        _
    $region40: #{_cnn_2layer_forward_impl.1} parent=5 // pred_fallthru
      _
    %p735 = scmp.le.s32.totalorder 2, %s11
    // Predicated region
    $region57: #{_cnn_2layer_forward_impl.1} parent=5 // pred_check
      %p736 = pneg %p735
    $region58: #{_cnn_2layer_forward_impl.1} parent=5 // pred_check_branch
      %738 = sbr.rel (%p736) target = $region60
    $region59: #{_cnn_2layer_forward_impl.1} parent=5 // pred_region
      %s739 = ssub.s32 %s11, 2
    $region60: #{_cnn_2layer_forward_impl.1} parent=5 // pred_fallthru
      _
  $region6: #{_cnn_2layer_forward_impl.1} parent=0 // loop_footer
    %s15 = sadd.s32 1, %s11
  $region7: #{_cnn_2layer_forward_impl.1} parent=0 // loop_footer_branch
    %10 = sbr.rel target = $region3
  $region8: #{_cnn_2layer_forward_impl.1} parent=0 // loop_exit
    _

</llo_original>
